<compile_context>
chip_gen: v7x
topology: tpu7x:2x2x1
jax: 0.10.0
libtpu: 0.0.40
codegen_flags: <defaults>
</compile_context>

<pallas_src>
import functools

import jax
import jax.numpy as jnp
from jax import lax
from jax.experimental import pallas as pl
from jax.experimental.pallas import tpu as pltpu


def _round_up(n, m):
    return ((n + m - 1) // m) * m


def _encoder_tiles(n, row_cap, k_cap):
    """Return (Np, tm, tk) with Np >= n padded so tm|Np, tk|Np and every block
    dim is a multiple of (8, 128) or equal to the full (padded) dim."""
    row_cap = max(8, (row_cap // 8) * 8)
    if n <= row_cap:
        np_ = _round_up(n, 8)
        return np_, np_, np_          # single full-dim block per axis
    tm = max(128, (row_cap // 128) * 128)   # sublane- and lane-friendly
    np_ = _round_up(n, tm)
    tk = tm
    while tk * 2 <= k_cap and np_ % (tk * 2) == 0:
        tk *= 2
    return np_, tm, tk


def _pick_div_tile(np_, cap, quantum):
    """Largest multiple of `quantum` <= cap dividing np_, else the full dim."""
    if np_ <= cap:
        return np_
    t = (cap // quantum) * quantum
    while t >= quantum:
        if np_ % t == 0:
            return t
        t -= quantum
    return np_


# --------------------------------------------------------------------------
# Pass 1: hw = relu((adj @ x) @ W1 + b1) @ [W_mu | W_logvar]      -> (N, 2L)
# grid = (row tiles i, K tiles k); adj[i,k] @ x[k] accumulated in f32 scratch.
# x is VMEM-resident (constant-index BlockSpec) when it fits.
# --------------------------------------------------------------------------
def _encoder_hw_kernel(adj_ref, x_ref, w1_ref, b1_ref, wcat_ref,
                       hw_ref, acc_ref, *, compute_dtype, tk, x_resident):
    k = pl.program_id(1)

    @pl.when(k == 0)
    def _():
        acc_ref[...] = jnp.zeros_like(acc_ref)

    if x_resident:
        xk = x_ref[pl.ds(pl.multiple_of(k * tk, tk), tk), :]
    else:
        xk = x_ref[...]

    acc_ref[...] += jnp.dot(adj_ref[...], xk,
                            preferred_element_type=jnp.float32)

    @pl.when(k == pl.num_programs(1) - 1)
    def _():
        ax = acc_ref[...].astype(compute_dtype)                      # (tm, F)
        h = jnp.dot(ax, w1_ref[...], preferred_element_type=jnp.float32)
        h = jnp.maximum(h + b1_ref[...], 0.0)                        # (tm, H)
        hw_ref[...] = jnp.dot(
            h.astype(compute_dtype), wcat_ref[...],
            preferred_element_type=jnp.float32).astype(hw_ref.dtype)  # (tm, 2L)


# --------------------------------------------------------------------------
# Pass 2: [mu | logvar | z] slab.  mu|logvar = adj @ hw + b_cat,
#         z = mu + exp(logvar) * eps.                               -> (N, 3L)
# hw is VMEM-resident (constant-index BlockSpec) when it fits.
# --------------------------------------------------------------------------
def _encoder_z_kernel(adj_ref, hw_ref, bcat_ref, eps_ref,
                      out_ref, acc_ref, *, latent_dim, tk, hw_resident):
    k = pl.program_id(1)

    @pl.when(k == 0)
    def _():
        acc_ref[...] = jnp.zeros_like(acc_ref)

    if hw_resident:
        hwk = hw_ref[pl.ds(pl.multiple_of(k * tk, tk), tk), :]
    else:
        hwk = hw_ref[...]

    acc_ref[...] += jnp.dot(adj_ref[...], hwk,
                            preferred_element_type=jnp.float32)

    @pl.when(k == pl.num_programs(1) - 1)
    def _():
        ml = acc_ref[...] + bcat_ref[...]                            # (tm, 2L)
        mu = ml[:, :latent_dim]
        logvar = ml[:, latent_dim:]
        z = mu + jnp.exp(logvar) * eps_ref[...]                      # (tm, L)
        out_ref[...] = jnp.concatenate([ml, z], axis=-1)             # one store


# --------------------------------------------------------------------------
# Pass 3: adj_recon[i, j] = z[i] @ z[j].T  (contraction on dim 1, no transpose)
# --------------------------------------------------------------------------
def _decoder_kernel(zi_ref, zj_ref, out_ref):
    out_ref[...] = lax.dot_general(
        zi_ref[...], zj_ref[...],
        dimension_numbers=(((1,), (1,)), ((), ())),
        preferred_element_type=jnp.float32)


def vgae_forward(x, adj, params, eps, *, compute_dtype=jnp.bfloat16,
                 row_tile=512, k_tile=2048, dec_row_tile=256, dec_col_tile=2048,
                 resident_budget_bytes=4 * 1024 * 1024):
    N, F = x.shape
    H = params["w1"].shape[1]
    L = params["w_mu"].shape[1]

    cd = compute_dtype
    cd_bytes = jnp.dtype(cd).itemsize

    # ---- padding + tile selection (keeps every block (8,128)-legal) ---------
    Np, tm, tk = _encoder_tiles(N, row_tile, k_tile)
    pad = Np - N
    if pad:
        x = jnp.pad(x, ((0, pad), (0, 0)))
        adj = jnp.pad(adj, ((0, pad), (0, pad)))
        eps = jnp.pad(eps, ((0, pad), (0, 0)))
    n_i = Np // tm
    n_k = Np // tk

    # NOTE: pass adj already in `compute_dtype` (bf16) to make this cast a
    # no-op; otherwise it is one extra pass over the N^2 matrix, done once.
    adj_c = adj if adj.dtype == cd else adj.astype(cd)
    x_c = x if x.dtype == cd else x.astype(cd)
    w1 = params["w1"].astype(cd)
    b1 = params["b1"].astype(jnp.float32)
    # Fused mu/logvar projection: (H, 2L) weight, (1, 2L) bias.
    w_cat = jnp.concatenate([params["w_mu"], params["w_logvar"]], axis=1).astype(cd)
    b_cat = jnp.concatenate([params["b_mu"], params["b_logvar"]], axis=1).astype(jnp.float32)
    eps_f = eps.astype(jnp.float32)

    x_resident = Np * F * cd_bytes <= resident_budget_bytes
    hw_resident = Np * 2 * L * cd_bytes <= resident_budget_bytes

    enc_cparams = pltpu.CompilerParams(
        dimension_semantics=("parallel", "arbitrary"),
        vmem_limit_bytes=48 * 1024 * 1024)

    # ---- Pass 1: hw (Np, 2L) in compute_dtype --------------------------------
    x_spec = (pl.BlockSpec((Np, F), lambda i, k: (0, 0)) if x_resident
              else pl.BlockSpec((tk, F), lambda i, k: (k, 0)))
    cost1 = pl.CostEstimate(
        flops=int(2 * Np * Np * F + 2 * Np * F * H + 2 * Np * H * 2 * L),
        transcendentals=0,
        bytes_accessed=int(Np * Np * cd_bytes
                           + Np * F * cd_bytes * (1 if x_resident else n_i)
                           + Np * 2 * L * cd_bytes))

    hw = pl.pallas_call(
        functools.partial(_encoder_hw_kernel, compute_dtype=cd, tk=tk,
                          x_resident=x_resident),
        out_shape=jax.ShapeDtypeStruct((Np, 2 * L), cd),
        grid_spec=pltpu.PrefetchScalarGridSpec(
            num_scalar_prefetch=0,
            grid=(n_i, n_k),
            in_specs=[
                pl.BlockSpec((tm, tk), lambda i, k: (i, k)),      # adj
                x_spec,                                           # x
                pl.BlockSpec((F, H), lambda i, k: (0, 0)),        # W1
                pl.BlockSpec((1, H), lambda i, k: (0, 0)),        # b1
                pl.BlockSpec((H, 2 * L), lambda i, k: (0, 0)),    # W_cat
            ],
            out_specs=pl.BlockSpec((tm, 2 * L), lambda i, k: (i, 0)),
            scratch_shapes=[pltpu.VMEM((tm, F), jnp.float32)],
        ),
        compiler_params=enc_cparams,
        cost_estimate=cost1,
    )(adj_c, x_c, w1, b1, w_cat)

    # ---- Pass 2: packed [mu | logvar | z] slab (Np, 3L) ----------------------
    hw_spec = (pl.BlockSpec((Np, 2 * L), lambda i, k: (0, 0)) if hw_resident
               else pl.BlockSpec((tk, 2 * L), lambda i, k: (k, 0)))
    cost2 = pl.CostEstimate(
        flops=int(2 * Np * Np * 2 * L),
        transcendentals=int(Np * L),
        bytes_accessed=int(Np * Np * cd_bytes
                           + Np * 2 * L * cd_bytes * (1 if hw_resident else n_i)
                           + Np * L * 4 + Np * 3 * L * 4))

    slab = pl.pallas_call(
        functools.partial(_encoder_z_kernel, latent_dim=L, tk=tk,
                          hw_resident=hw_resident),
        out_shape=jax.ShapeDtypeStruct((Np, 3 * L), jnp.float32),
        grid_spec=pltpu.PrefetchScalarGridSpec(
            num_scalar_prefetch=0,
            grid=(n_i, n_k),
            in_specs=[
                pl.BlockSpec((tm, tk), lambda i, k: (i, k)),      # adj
                hw_spec,                                          # hw
                pl.BlockSpec((1, 2 * L), lambda i, k: (0, 0)),    # b_cat
                pl.BlockSpec((tm, L), lambda i, k: (i, 0)),       # eps
            ],
            out_specs=pl.BlockSpec((tm, 3 * L), lambda i, k: (i, 0)),
            scratch_shapes=[pltpu.VMEM((tm, 2 * L), jnp.float32)],
        ),
        compiler_params=enc_cparams,
        cost_estimate=cost2,
    )(adj_c, hw, b_cat, eps_f)

    mu = slab[:N, :L]
    logvar = slab[:N, L:2 * L]
    z = slab[:N, 2 * L:]

    # ---- Pass 3: adj_recon = z @ z.T (wide, lane-dense output tiles) ---------
    # Padded z rows only affect rows/cols >= N, which are sliced away.
    z_full = slab[:, 2 * L:]
    ti = _pick_div_tile(Np, dec_row_tile, 8)
    tj = _pick_div_tile(Np, dec_col_tile, 128)
    cost3 = pl.CostEstimate(
        flops=int(2 * Np * Np * L),
        transcendentals=0,
        bytes_accessed=int(Np * Np * 4 + 2 * Np * L * 4))

    adj_recon = pl.pallas_call(
        _decoder_kernel,
        out_shape=jax.ShapeDtypeStruct((Np, Np), jnp.float32),
        grid_spec=pltpu.PrefetchScalarGridSpec(
            num_scalar_prefetch=0,
            grid=(Np // ti, Np // tj),
            in_specs=[
                pl.BlockSpec((ti, L), lambda i, j: (i, 0)),       # z rows
                pl.BlockSpec((tj, L), lambda i, j: (j, 0)),       # z cols
            ],
            out_specs=pl.BlockSpec((ti, tj), lambda i, j: (i, j)),
        ),
        compiler_params=pltpu.CompilerParams(
            dimension_semantics=("parallel", "parallel"),
            vmem_limit_bytes=48 * 1024 * 1024),
        cost_estimate=cost3,
    )(z_full, z_full)
    adj_recon = adj_recon[:N, :N]

    return {"adj_recon": adj_recon, "z": z, "mu": mu, "logvar": logvar}


def init_params(key, nfeat, nhid, latent_dim):
    k1, k2, k3 = jax.random.split(key, 3)

    def glorot(k, fan_in, fan_out):
        scale = jnp.sqrt(6.0 / (fan_in + fan_out))
        return jax.random.uniform(k, (fan_in, fan_out), jnp.float32, -scale, scale)

    return {
        "w1": glorot(k1, nfeat, nhid),
        "b1": jnp.zeros((1, nhid), jnp.float32),
        "w_mu": glorot(k2, nhid, latent_dim),
        "b_mu": jnp.zeros((1, latent_dim), jnp.float32),
        "w_logvar": glorot(k3, nhid, latent_dim),
        "b_logvar": jnp.zeros((1, latent_dim), jnp.float32),
    }


if __name__ == "__main__":
    N = 64          # number of nodes
    NFEAT = 16      # data.num_features
    NHID = 32       # nhid (module default)
    LATENT = 16     # latent_dim (module default)

    key = jax.random.PRNGKey(0)
    kx, kadj, kp, keps = jax.random.split(key, 4)

    x = jax.random.normal(kx, (N, NFEAT), dtype=jnp.float32)

    # symmetric normalized adjacency (with self-loops), dense
    a = (jax.random.uniform(kadj, (N, N)) < 0.1).astype(jnp.float32)
    a = jnp.maximum(a, a.T)
    a = a + jnp.eye(N, dtype=jnp.float32)
    deg = jnp.sum(a, axis=1)
    d_inv_sqrt = 1.0 / jnp.sqrt(deg)
    adj = a * d_inv_sqrt[:, None] * d_inv_sqrt[None, :]

    params = init_params(kp, NFEAT, NHID, LATENT)
    eps = jax.random.normal(keps, (N, LATENT), dtype=jnp.float32)

    # pure-JAX reference (original operation order)
    h_ref = jnp.maximum(adj @ (x @ params["w1"]) + params["b1"], 0.0)
    mu_ref = adj @ (h_ref @ params["w_mu"]) + params["b_mu"]
    lv_ref = adj @ (h_ref @ params["w_logvar"]) + params["b_logvar"]
    z_ref = mu_ref + jnp.exp(lv_ref) * eps
    ar_ref = z_ref @ z_ref.T

    # f32 compute path: tight tolerance check
    out32 = vgae_forward(x, adj, params, eps, compute_dtype=jnp.float32)
    jax.block_until_ready(out32)
    assert jnp.allclose(out32["mu"], mu_ref, atol=1e-4)
    assert jnp.allclose(out32["logvar"], lv_ref, atol=1e-4)
    assert jnp.allclose(out32["z"], z_ref, atol=1e-4)
    assert jnp.allclose(out32["adj_recon"], ar_ref, atol=1e-3)

    # default bf16 compute path (fast path for the HBM-bound adj stream):
    # f32 accumulation is kept, but inputs are bf16 -> looser tolerances.
    out = vgae_forward(x, adj, params, eps)
    jax.block_until_ready(out)
    assert jnp.allclose(out["mu"], mu_ref, rtol=5e-2, atol=5e-2)
    assert jnp.allclose(out["logvar"], lv_ref, rtol=5e-2, atol=5e-2)
    assert jnp.allclose(out["z"], z_ref, rtol=5e-2, atol=5e-2)
    assert jnp.allclose(out["adj_recon"], ar_ref, rtol=5e-2, atol=1e-1)

    print("KERNEL_OK")
</pallas_src>

<mosaic_0001>
module attributes {stable_mosaic.version = 11 : i64} {
  func.func @_encoder_hw_kernel(%arg0: i32, %arg1: i32, %arg2: memref<64x64xf32, #tpu.memory_space<vmem>>, %arg3: memref<64x16xf32, #tpu.memory_space<vmem>>, %arg4: memref<16x32xf32, #tpu.memory_space<vmem>>, %arg5: memref<1x32xf32, #tpu.memory_space<vmem>>, %arg6: memref<32x32xf32, #tpu.memory_space<vmem>>, %arg7: memref<64x32xf32, #tpu.memory_space<vmem>>, %arg8: memref<64x16xf32, #tpu.memory_space<vmem>>) attributes {dimension_semantics = [#tpu.dimension_semantics<parallel>, #tpu.dimension_semantics<arbitrary>], iteration_bounds = array<i64: 1, 1>, scalar_prefetch = 0 : i64, scratch_operands = 1 : i64, tpu.core_type = #tpu.core_type<tc>, window_params = [{transform_indices = @transform_0, window_bounds = array<i64: 64, 64>}, {pipeline_mode = #tpu.pipeline_mode<synchronous>, transform_indices = @transform_1, window_bounds = array<i64: 64, 16>}, {pipeline_mode = #tpu.pipeline_mode<synchronous>, transform_indices = @transform_2, window_bounds = array<i64: 16, 32>}, {pipeline_mode = #tpu.pipeline_mode<synchronous>, transform_indices = @transform_3, window_bounds = array<i64: 1, 32>}, {pipeline_mode = #tpu.pipeline_mode<synchronous>, transform_indices = @transform_4, window_bounds = array<i64: 32, 32>}, {transform_indices = @transform_5, window_bounds = array<i64: 64, 32>}]} {
    %c0_i32 = arith.constant 0 : i32
    %0 = arith.cmpi eq, %arg1, %c0_i32 : i32
    %1 = arith.extui %0 : i1 to i32
    %c0_i32_0 = arith.constant 0 : i32
    %2 = arith.cmpi ne, %1, %c0_i32_0 : i32
    scf.if %2 {
      %cst_9 = arith.constant 0.000000e+00 : f32
      %15 = vector.broadcast %cst_9 : f32 to vector<64x16xf32>
      %c0_10 = arith.constant 0 : index
      %c0_11 = arith.constant 0 : index
      %16 = vector.load %arg8[%c0_10, %c0_11] : memref<64x16xf32, #tpu.memory_space<vmem>>, vector<64x16xf32>
      tpu.vector_store %arg8[%c0_10, %c0_11], %15 {strides = array<i32>} : memref<64x16xf32, #tpu.memory_space<vmem>>, vector<64x16xf32>,
    } else {
    }
    %c64_i32 = arith.constant 64 : i32
    %3 = arith.muli %arg1, %c64_i32 : i32
    %4 = tpu.assume_multiple %3, 64 : i32
    %5 = arith.index_cast %4 : i32 to index
    %c0 = arith.constant 0 : index
    %6 = vector.load %arg3[%5, %c0] : memref<64x16xf32, #tpu.memory_space<vmem>>, vector<64x16xf32>
    %c0_1 = arith.constant 0 : index
    %c0_2 = arith.constant 0 : index
    %7 = vector.load %arg8[%c0_1, %c0_2] : memref<64x16xf32, #tpu.memory_space<vmem>>, vector<64x16xf32>
    %c0_3 = arith.constant 0 : index
    %c0_4 = arith.constant 0 : index
    %8 = vector.load %arg2[%c0_3, %c0_4] : memref<64x64xf32, #tpu.memory_space<vmem>>, vector<64x64xf32>
    %cst = arith.constant dense<0.000000e+00> : vector<64x16xf32>
    %9 = tpu.matmul %8, %6, %cst {dimension_numbers = #tpu.dot_dimension_numbers<[1], [0], [0], [1], [0, 0, 1, 1], [], []>} : vector<64x64xf32>, vector<64x16xf32>, vector<64x16xf32> -> vector<64x16xf32>
    %10 = arith.addf %7, %9 : vector<64x16xf32>
    %c0_5 = arith.constant 0 : index
    %c0_6 = arith.constant 0 : index
    %11 = vector.load %arg8[%c0_5, %c0_6] : memref<64x16xf32, #tpu.memory_space<vmem>>, vector<64x16xf32>
    tpu.vector_store %arg8[%c0_5, %c0_6], %10 {strides = array<i32>} : memref<64x16xf32, #tpu.memory_space<vmem>>, vector<64x16xf32>,
    %c0_i32_7 = arith.constant 0 : i32
    %12 = arith.cmpi eq, %arg1, %c0_i32_7 : i32
    %13 = arith.extui %12 : i1 to i32
    %c0_i32_8 = arith.constant 0 : i32
    %14 = arith.cmpi ne, %13, %c0_i32_8 : i32
    scf.if %14 {
      %c0_9 = arith.constant 0 : index
      %c0_10 = arith.constant 0 : index
      %15 = vector.load %arg8[%c0_9, %c0_10] : memref<64x16xf32, #tpu.memory_space<vmem>>, vector<64x16xf32>
      %c0_11 = arith.constant 0 : index
      %c0_12 = arith.constant 0 : index
      %16 = vector.load %arg4[%c0_11, %c0_12] : memref<16x32xf32, #tpu.memory_space<vmem>>, vector<16x32xf32>
      %cst_13 = arith.constant dense<0.000000e+00> : vector<64x32xf32>
      %17 = tpu.matmul %15, %16, %cst_13 {dimension_numbers = #tpu.dot_dimension_numbers<[1], [0], [0], [1], [0, 0, 1, 1], [], []>} : vector<64x16xf32>, vector<16x32xf32>, vector<64x32xf32> -> vector<64x32xf32>
      %c0_14 = arith.constant 0 : index
      %c0_15 = arith.constant 0 : index
      %18 = vector.load %arg5[%c0_14, %c0_15] : memref<1x32xf32, #tpu.memory_space<vmem>>, vector<1x32xf32>
      %19 = vector.broadcast %18 : vector<1x32xf32> to vector<64x32xf32>
      %20 = arith.addf %17, %19 : vector<64x32xf32>
      %cst_16 = arith.constant 0.000000e+00 : f32
      %21 = vector.broadcast %cst_16 : f32 to vector<64x32xf32>
      %22 = arith.maximumf %20, %21 : vector<64x32xf32>
      %c0_17 = arith.constant 0 : index
      %c0_18 = arith.constant 0 : index
      %23 = vector.load %arg6[%c0_17, %c0_18] : memref<32x32xf32, #tpu.memory_space<vmem>>, vector<32x32xf32>
      %cst_19 = arith.constant dense<0.000000e+00> : vector<64x32xf32>
      %24 = tpu.matmul %22, %23, %cst_19 {dimension_numbers = #tpu.dot_dimension_numbers<[1], [0], [0], [1], [0, 0, 1, 1], [], []>} : vector<64x32xf32>, vector<32x32xf32>, vector<64x32xf32> -> vector<64x32xf32>
      %c0_20 = arith.constant 0 : index
      %c0_21 = arith.constant 0 : index
      %25 = vector.load %arg7[%c0_20, %c0_21] : memref<64x32xf32, #tpu.memory_space<vmem>>, vector<64x32xf32>
      tpu.vector_store %arg7[%c0_20, %c0_21], %24 {strides = array<i32>} : memref<64x32xf32, #tpu.memory_space<vmem>>, vector<64x32xf32>,
    } else {
    }
    return
  }
  func.func @transform_0(%arg0: i32, %arg1: i32) -> (i32, i32) {
    %c0_i32 = arith.constant 0 : i32
    return %arg0, %arg1 : i32, i32
  }
  func.func @transform_1(%arg0: i32, %arg1: i32) -> (i32, i32) {
    %c0_i32 = arith.constant 0 : i32
    %c0_i32_0 = arith.constant 0 : i32
    %c0_i32_1 = arith.constant 0 : i32
    return %c0_i32, %c0_i32_0 : i32, i32
  }
  func.func @transform_2(%arg0: i32, %arg1: i32) -> (i32, i32) {
    %c0_i32 = arith.constant 0 : i32
    %c0_i32_0 = arith.constant 0 : i32
    %c0_i32_1 = arith.constant 0 : i32
    return %c0_i32, %c0_i32_0 : i32, i32
  }
  func.func @transform_3(%arg0: i32, %arg1: i32) -> (i32, i32) {
    %c0_i32 = arith.constant 0 : i32
    %c0_i32_0 = arith.constant 0 : i32
    %c0_i32_1 = arith.constant 0 : i32
    return %c0_i32, %c0_i32_0 : i32, i32
  }
  func.func @transform_4(%arg0: i32, %arg1: i32) -> (i32, i32) {
    %c0_i32 = arith.constant 0 : i32
    %c0_i32_0 = arith.constant 0 : i32
    %c0_i32_1 = arith.constant 0 : i32
    return %c0_i32, %c0_i32_0 : i32, i32
  }
  func.func @transform_5(%arg0: i32, %arg1: i32) -> (i32, i32) {
    %c0_i32 = arith.constant 0 : i32
    %c0_i32_0 = arith.constant 0 : i32
    return %arg0, %c0_i32 : i32, i32
  }
}

</mosaic_0001>

<llo_original>
// kernel: tpu_custom_call.1
$region0: #{tpu_custom_call.1}
  #allocation0 [shape = 'u32[]', space=smem, size = 0x4, offset = 0x4, fixed_abs, tag = 'smem constant byte address 0x4 - core index']
  #allocation1 [shape = 'u32[144,128]{1,0:T(1,128)}', space=vmem, size = 0x12000, scoped, tag = 'internal scratch']
  #allocation2 [shape = 'f32[64,16]{1,0:T(8,128)}', space=vmem, size = 0x8000, scoped, tag = 'scratch operand']
  %s0 = inlined_call_operand.vmem [shape: f32[64,64], index: 0, kind: input, shape index: {}]
  %s1 = inlined_call_operand.vmem [shape: f32[64,16], index: 1, kind: input, shape index: {}]
  %s2 = inlined_call_operand.vmem [shape: f32[16,32], index: 2, kind: input, shape index: {}]
  %s3 = inlined_call_operand.vmem [shape: f32[1,32], index: 3, kind: input, shape index: {}]
  %s4 = inlined_call_operand.hbm [shape: f32[32,32], index: 4, kind: input, shape index: {}]
  %s5 = inlined_call_operand.vmem [shape: f32[64,32], index: 5, kind: output, shape index: {}]
  %s6 = sld [smem:[#allocation0]]
  $region42: #{tpu_custom_call.1} parent=0
    _
  %s8 = ssub.s32 1, %s6
  %s9 = scalar_select 0, %s8, %s6
  $region1: #{tpu_custom_call.1} parent=0
    #allocation3 [shape = 'u8[16384]{0}', space=vmem, size = 0x4000, scoped, tag = 'input window, operand 4, single buffered']
    #allocation4 [shape = 's32[1]{0}', space=sflag, size = 0x4, scoped, tag = 'scoped memory for tpu_custom_call.1']
    %10 = vsyncpa [#allocation4], 0
    // Predicated region
    $region2: #{tpu_custom_call.1} parent=1 // pred_check
      _
    $region3: #{tpu_custom_call.1} parent=1 // pred_check_branch
      %12 = sbr.rel (0) target = $region5
    $region4: #{tpu_custom_call.1} parent=1 // pred_region
      _
    $region5: #{tpu_custom_call.1} parent=1 // pred_fallthru
      _
    // Predicated region
    $region6: #{tpu_custom_call.1} parent=1 // pred_check
      _
    $region7: #{tpu_custom_call.1} parent=1 // pred_check_branch
      %14 = sbr.rel (0) target = $region9
    $region8: #{tpu_custom_call.1} parent=1 // pred_region
      _
    $region9: #{tpu_custom_call.1} parent=1 // pred_fallthru
      _
    // Predicated region
    $region10: #{tpu_custom_call.1} parent=1 // pred_check
      _
    $region11: #{tpu_custom_call.1} parent=1 // pred_check_branch
      %16 = sbr.rel (0) target = $region13
    $region12: #{tpu_custom_call.1} parent=1 // pred_region
      _
    $region13: #{tpu_custom_call.1} parent=1 // pred_fallthru
      _
    // Predicated region
    $region14: #{tpu_custom_call.1} parent=1 // pred_check
      _
    $region15: #{tpu_custom_call.1} parent=1 // pred_check_branch
      %18 = sbr.rel (0) target = $region17
    $region16: #{tpu_custom_call.1} parent=1 // pred_region
      _
    $region17: #{tpu_custom_call.1} parent=1 // pred_fallthru
      _
    // Predicated region
    $region18: #{tpu_custom_call.1} parent=1 // pred_check
      _
    $region19: #{tpu_custom_call.1} parent=1 // pred_check_branch
      %20 = sbr.rel (0) target = $region21
    $region20: #{tpu_custom_call.1} parent=1 // pred_region
      %s22 = ssub.s32 512, 512
      %23 = vsyncadd [#allocation4], %s22
      %s24 = sshll.u32 [#allocation3], 4
      %s25 = int_to_ptr.vmem [resolvable:$true] %s24
      %30 = dma.hbm_to_vmem [thread:$0]  %s4, 512, %s25, [#allocation4], 128, 128, 8
    $region21: #{tpu_custom_call.1} parent=1 // pred_fallthru
      _
    // Predicated region
    $region22: #{tpu_custom_call.1} parent=1 // pred_check
      _
    $region23: #{tpu_custom_call.1} parent=1 // pred_check_branch
      %32 = sbr.rel (0) target = $region25
    $region24: #{tpu_custom_call.1} parent=1 // pred_region
      %33 = dma.done [#allocation4], 512
    $region25: #{tpu_custom_call.1} parent=1 // pred_fallthru
      _
    %p34 = scmp.eq.s32.totalorder 0, 0
    // Predicated region
    $region26: #{tpu_custom_call.1} parent=1 // pred_check
      %p35 = pneg %p34
    $region27: #{tpu_custom_call.1} parent=1 // pred_check_branch
      %37 = sbr.rel (%p35) target = $region29
    $region28: #{tpu_custom_call.1} parent=1 // pred_region
      %vm38 = vcmask 130048
      %39 = vst.msk [vmem:[#allocation2] sm:$0xff] %vm38, 0.0
      %40 = vst.msk [vmem:[#allocation2 + $0x8] sm:$0xff] %vm38, 0.0
      %41 = vst.msk [vmem:[#allocation2 + $0x10] sm:$0xff] %vm38, 0.0
      %42 = vst.msk [vmem:[#allocation2 + $0x18] sm:$0xff] %vm38, 0.0
      %43 = vst.msk [vmem:[#allocation2 + $0x20] sm:$0xff] %vm38, 0.0
      %44 = vst.msk [vmem:[#allocation2 + $0x28] sm:$0xff] %vm38, 0.0
      %45 = vst.msk [vmem:[#allocation2 + $0x30] sm:$0xff] %vm38, 0.0
      %46 = vst.msk [vmem:[#allocation2 + $0x38] sm:$0xff] %vm38, 0.0
    $region29: #{tpu_custom_call.1} parent=1 // pred_fallthru
      _
    %s47 = smul.u32 0, 64
    %s48 = scalar_lea.vmem %s1, %s47
    %v49 = vld [vmem:[%s48] sm:$0xff]
    %v50 = vld [vmem:[%s48 + $0x8] sm:$0xff]
    %v51 = vld [vmem:[%s48 + $0x10] sm:$0xff]
    %v52 = vld [vmem:[%s48 + $0x18] sm:$0xff]
    %v53 = vld [vmem:[%s48 + $0x20] sm:$0xff]
    %v54 = vld [vmem:[%s48 + $0x28] sm:$0xff]
    %v55 = vld [vmem:[%s48 + $0x30] sm:$0xff]
    %v56 = vld [vmem:[%s48 + $0x38] sm:$0xff]
    %v57 = vld [vmem:[#allocation2] sm:$0xff]
    %v58 = vld [vmem:[#allocation2 + $0x8] sm:$0xff]
    %v59 = vld [vmem:[#allocation2 + $0x10] sm:$0xff]
    %v60 = vld [vmem:[#allocation2 + $0x18] sm:$0xff]
    %v61 = vld [vmem:[#allocation2 + $0x20] sm:$0xff]
    %v62 = vld [vmem:[#allocation2 + $0x28] sm:$0xff]
    %v63 = vld [vmem:[#allocation2 + $0x30] sm:$0xff]
    %v64 = vld [vmem:[#allocation2 + $0x38] sm:$0xff]
    %v65 = vld [vmem:[%s0] sm:$0xff]
    %v66 = vld [vmem:[%s0 + $0x8] sm:$0xff]
    %v67 = vld [vmem:[%s0 + $0x10] sm:$0xff]
    %v68 = vld [vmem:[%s0 + $0x18] sm:$0xff]
    %v69 = vld [vmem:[%s0 + $0x20] sm:$0xff]
    %v70 = vld [vmem:[%s0 + $0x28] sm:$0xff]
    %v71 = vld [vmem:[%s0 + $0x30] sm:$0xff]
    %v72 = vld [vmem:[%s0 + $0x38] sm:$0xff]
    %vm73 = vcmask 523264
    %v75 = vsel %vm73, %v65, 0
    %v78 = vsel %vm73, %v66, 0
    %v81 = vsel %vm73, %v67, 0
    %v84 = vsel %vm73, %v68, 0
    %v87 = vsel %vm73, %v69, 0
    %v90 = vsel %vm73, %v70, 0
    %v93 = vsel %vm73, %v71, 0
    %v96 = vsel %vm73, %v72, 0
    %98 = vmatprep.subr.mxu0 0.0
    %99 = vmatpush1.msra.mxu0 %v49
    %100 = vmatprep.subr.mxu0 0.0
    %101 = vmatpush1.msra.mxu0 %v50
    %102 = vmatprep.subr.mxu0 0.0
    %103 = vmatpush1.msra.mxu0 %v51
    %104 = vmatprep.subr.mxu0 0.0
    %105 = vmatpush1.msra.mxu0 %v52
    %106 = vmatprep.subr.mxu0 0.0
    %107 = vmatpush1.msra.mxu0 %v53
    %108 = vmatprep.subr.mxu0 0.0
    %109 = vmatpush1.msra.mxu0 %v54
    %110 = vmatprep.subr.mxu0 0.0
    %111 = vmatpush1.msra.mxu0 %v55
    %112 = vmatprep.subr.mxu0 0.0
    %113 = vmatpush1.msra.mxu0 %v56
    %114 = vmatprep.subr.mxu0 0.0
    %115 = vmatpush1.msra.mxu0 0.0
    %116 = vmatprep.subr.mxu0 0.0
    %117 = vmatpush1.msra.mxu0 0.0
    %118 = vmatprep.subr.mxu0 0.0
    %119 = vmatpush1.msra.mxu0 0.0
    %120 = vmatprep.subr.mxu0 0.0
    %121 = vmatpush1.msra.mxu0 0.0
    %122 = vmatprep.subr.mxu0 0.0
    %123 = vmatpush1.msra.mxu0 0.0
    %124 = vmatprep.subr.mxu0 0.0
    %125 = vmatpush1.msra.mxu0 0.0
    %126 = vmatprep.subr.mxu0 0.0
    %127 = vmatpush1.msra.mxu0 0.0
    %128 = vmatprep.subr.mxu0 0.0
    %129 = vmatpush1.msra.mxu0 0.0
    %130 = vmatprep.subr.mxu0 0.0
    %131 = vmatpush1.msra.mxu0 0.0
    %132 = vmatprep.subr.mxu0 0.0
    %133 = vmatpush1.msra.mxu0 0.0
    %134 = vmatprep.subr.mxu0 0.0
    %135 = vmatpush1.msra.mxu0 0.0
    %136 = vmatprep.subr.mxu0 0.0
    %137 = vmatpush1.msra.mxu0 0.0
    %138 = vmatprep.subr.mxu0 0.0
    %139 = vmatpush1.msra.mxu0 0.0
    %140 = vmatprep.subr.mxu0 0.0
    %141 = vmatpush1.msra.mxu0 0.0
    %142 = vmatprep.subr.mxu0 0.0
    %143 = vmatpush1.msra.mxu0 0.0
    %144 = vmatprep.subr.mxu0 0.0
    %145 = vmatpush1.msra.mxu0 0.0
    %146 = vmatprep.subr.mxu0 0.0
    %147 = vmatpush1.msra.mxu0 0.0
    %148 = vmatprep.subr.mxu0 0.0
    %149 = vmatpush1.msra.mxu0 0.0
    %150 = vmatprep.subr.mxu0 0.0
    %151 = vmatpush1.msra.mxu0 0.0
    %152 = vmatprep.subr.mxu0 0.0
    %153 = vmatpush1.msra.mxu0 0.0
    %154 = vmatprep.subr.mxu0 0.0
    %155 = vmatpush1.msra.mxu0 0.0
    %156 = vmatprep.subr.mxu0 0.0
    %157 = vmatpush1.msra.mxu0 0.0
    %158 = vmatprep.subr.mxu0 0.0
    %159 = vmatpush1.msra.mxu0 0.0
    %160 = vmatprep.subr.mxu0 0.0
    %161 = vmatpush1.msra.mxu0 0.0
    %162 = vmatprep.mubr.f32.mxu0 0.0
    %163 = vmatmul.mubr.f32.gmra.mrb[0].mxu0 %v75
    %v164 = vpop.f32.mrb[0].mxu0
    %v165 = vadd.f32 0.0, %v164
    %v166 = vpop.f32.mrb[0].mxu0
    %167 = vmatprep.mubr.f32.mxu0 0.0
    %168 = vmatmul.mubr.f32.gmra.mrb[0].mxu0 %v78
    %v169 = vpop.f32.mrb[0].mxu0
    %v170 = vadd.f32 0.0, %v169
    %v171 = vpop.f32.mrb[0].mxu0
    %172 = vmatprep.mubr.f32.mxu0 0.0
    %173 = vmatmul.mubr.f32.gmra.mrb[0].mxu0 %v81
    %v174 = vpop.f32.mrb[0].mxu0
    %v175 = vadd.f32 0.0, %v174
    %v176 = vpop.f32.mrb[0].mxu0
    %177 = vmatprep.mubr.f32.mxu0 0.0
    %178 = vmatmul.mubr.f32.gmra.mrb[0].mxu0 %v84
    %v179 = vpop.f32.mrb[0].mxu0
    %v180 = vadd.f32 0.0, %v179
    %v181 = vpop.f32.mrb[0].mxu0
    %182 = vmatprep.mubr.f32.mxu0 0.0
    %183 = vmatmul.mubr.f32.gmra.mrb[0].mxu0 %v87
    %v184 = vpop.f32.mrb[0].mxu0
    %v185 = vadd.f32 0.0, %v184
    %v186 = vpop.f32.mrb[0].mxu0
    %187 = vmatprep.mubr.f32.mxu0 0.0
    %188 = vmatmul.mubr.f32.gmra.mrb[0].mxu0 %v90
    %v189 = vpop.f32.mrb[0].mxu0
    %v190 = vadd.f32 0.0, %v189
    %v191 = vpop.f32.mrb[0].mxu0
    %192 = vmatprep.mubr.f32.mxu0 0.0
    %193 = vmatmul.mubr.f32.gmra.mrb[0].mxu0 %v93
    %v194 = vpop.f32.mrb[0].mxu0
    %v195 = vadd.f32 0.0, %v194
    %v196 = vpop.f32.mrb[0].mxu0
    %197 = vmatprep.mubr.f32.mxu0 0.0
    %198 = vmatmul.mubr.f32.gmra.mrb[0].mxu0 %v96
    %v199 = vpop.f32.mrb[0].mxu0
    %v200 = vadd.f32 0.0, %v199
    %v201 = vpop.f32.mrb[0].mxu0
    %202 = vdwg.mxu0
    %v203 = vadd.f32 %v57, %v165
    %v204 = vadd.f32 %v58, %v170
    %v205 = vadd.f32 %v59, %v175
    %v206 = vadd.f32 %v60, %v180
    %v207 = vadd.f32 %v61, %v185
    %v208 = vadd.f32 %v62, %v190
    %v209 = vadd.f32 %v63, %v195
    %v210 = vadd.f32 %v64, %v200
    %vm211 = vcmask 130048
    %212 = vst.msk [vmem:[#allocation2] sm:$0xff] %vm211, %v203
    %213 = vst.msk [vmem:[#allocation2 + $0x8] sm:$0xff] %vm211, %v204
    %214 = vst.msk [vmem:[#allocation2 + $0x10] sm:$0xff] %vm211, %v205
    %215 = vst.msk [vmem:[#allocation2 + $0x18] sm:$0xff] %vm211, %v206
    %216 = vst.msk [vmem:[#allocation2 + $0x20] sm:$0xff] %vm211, %v207
    %217 = vst.msk [vmem:[#allocation2 + $0x28] sm:$0xff] %vm211, %v208
    %218 = vst.msk [vmem:[#allocation2 + $0x30] sm:$0xff] %vm211, %v209
    %219 = vst.msk [vmem:[#allocation2 + $0x38] sm:$0xff] %vm211, %v210
    // Predicated region
    $region30: #{tpu_custom_call.1} parent=1 // pred_check
      %p220 = pneg %p34
    $region31: #{tpu_custom_call.1} parent=1 // pred_check_branch
      %222 = sbr.rel (%p220) target = $region33
    $region32: #{tpu_custom_call.1} parent=1 // pred_region
      %v223 = vld [vmem:[#allocation2] sm:$0xff]
      %v224 = vld [vmem:[#allocation2 + $0x8] sm:$0xff]
      %v225 = vld [vmem:[#allocation2 + $0x10] sm:$0xff]
      %v226 = vld [vmem:[#allocation2 + $0x18] sm:$0xff]
      %v227 = vld [vmem:[#allocation2 + $0x20] sm:$0xff]
      %v228 = vld [vmem:[#allocation2 + $0x28] sm:$0xff]
      %v229 = vld [vmem:[#allocation2 + $0x30] sm:$0xff]
      %v230 = vld [vmem:[#allocation2 + $0x38] sm:$0xff]
      %v231 = vld [vmem:[%s2] sm:$0xff]
      %v232 = vld [vmem:[%s2 + $0x8] sm:$0xff]
      %v233 = vld [vmem:[%s3] sm:$0x1]
      %v235 = vlaneseq
      %v236 = vshrl.u32 %v235, 7
      %v237 = vsub.s32 0, %v236
      %v238 = vrot.slane %v233, %v237
      %v241 = vsel %vm211, %v223, 0
      %v244 = vsel %vm211, %v224, 0
      %v247 = vsel %vm211, %v225, 0
      %v250 = vsel %vm211, %v226, 0
      %v253 = vsel %vm211, %v227, 0
      %v256 = vsel %vm211, %v228, 0
      %v259 = vsel %vm211, %v229, 0
      %v262 = vsel %vm211, %v230, 0
      %264 = vmatprep.subr.mxu0 0.0
      %265 = vmatpush1.msra.mxu0 %v231
      %266 = vmatprep.subr.mxu0 0.0
      %267 = vmatpush1.msra.mxu0 %v232
      %268 = vmatprep.subr.mxu0 0.0
      %269 = vmatpush1.msra.mxu0 0.0
      %270 = vmatprep.subr.mxu0 0.0
      %271 = vmatpush1.msra.mxu0 0.0
      %272 = vmatprep.subr.mxu0 0.0
      %273 = vmatpush1.msra.mxu0 0.0
      %274 = vmatprep.subr.mxu0 0.0
      %275 = vmatpush1.msra.mxu0 0.0
      %276 = vmatprep.subr.mxu0 0.0
      %277 = vmatpush1.msra.mxu0 0.0
      %278 = vmatprep.subr.mxu0 0.0
      %279 = vmatpush1.msra.mxu0 0.0
      %280 = vmatprep.subr.mxu0 0.0
      %281 = vmatpush1.msra.mxu0 0.0
      %282 = vmatprep.subr.mxu0 0.0
      %283 = vmatpush1.msra.mxu0 0.0
      %284 = vmatprep.subr.mxu0 0.0
      %285 = vmatpush1.msra.mxu0 0.0
      %286 = vmatprep.subr.mxu0 0.0
      %287 = vmatpush1.msra.mxu0 0.0
      %288 = vmatprep.subr.mxu0 0.0
      %289 = vmatpush1.msra.mxu0 0.0
      %290 = vmatprep.subr.mxu0 0.0
      %291 = vmatpush1.msra.mxu0 0.0
      %292 = vmatprep.subr.mxu0 0.0
      %293 = vmatpush1.msra.mxu0 0.0
      %294 = vmatprep.subr.mxu0 0.0
      %295 = vmatpush1.msra.mxu0 0.0
      %296 = vmatprep.subr.mxu0 0.0
      %297 = vmatpush1.msra.mxu0 0.0
      %298 = vmatprep.subr.mxu0 0.0
      %299 = vmatpush1.msra.mxu0 0.0
      %300 = vmatprep.subr.mxu0 0.0
      %301 = vmatpush1.msra.mxu0 0.0
      %302 = vmatprep.subr.mxu0 0.0
      %303 = vmatpush1.msra.mxu0 0.0
      %304 = vmatprep.subr.mxu0 0.0
      %305 = vmatpush1.msra.mxu0 0.0
      %306 = vmatprep.subr.mxu0 0.0
      %307 = vmatpush1.msra.mxu0 0.0
      %308 = vmatprep.subr.mxu0 0.0
      %309 = vmatpush1.msra.mxu0 0.0
      %310 = vmatprep.subr.mxu0 0.0
      %311 = vmatpush1.msra.mxu0 0.0
      %312 = vmatprep.subr.mxu0 0.0
      %313 = vmatpush1.msra.mxu0 0.0
      %314 = vmatprep.subr.mxu0 0.0
      %315 = vmatpush1.msra.mxu0 0.0
      %316 = vmatprep.subr.mxu0 0.0
      %317 = vmatpush1.msra.mxu0 0.0
      %318 = vmatprep.subr.mxu0 0.0
      %319 = vmatpush1.msra.mxu0 0.0
      %320 = vmatprep.subr.mxu0 0.0
      %321 = vmatpush1.msra.mxu0 0.0
      %322 = vmatprep.subr.mxu0 0.0
      %323 = vmatpush1.msra.mxu0 0.0
      %324 = vmatprep.subr.mxu0 0.0
      %325 = vmatpush1.msra.mxu0 0.0
      %326 = vmatprep.subr.mxu0 0.0
      %327 = vmatpush1.msra.mxu0 0.0
      %328 = vmatprep.mubr.f32.mxu0 0.0
      %329 = vmatmul.mubr.f32.gmra.mrb[0].mxu0 %v241
      %v330 = vpop.f32.mrb[0].mxu0
      %v331 = vadd.f32 %v238, %v330
      %v332 = vpop.f32.mrb[0].mxu0
      %333 = vmatprep.mubr.f32.mxu0 0.0
      %334 = vmatmul.mubr.f32.gmra.mrb[0].mxu0 %v244
      %v335 = vpop.f32.mrb[0].mxu0
      %v336 = vadd.f32 %v238, %v335
      %v337 = vpop.f32.mrb[0].mxu0
      %338 = vmatprep.mubr.f32.mxu0 0.0
      %339 = vmatmul.mubr.f32.gmra.mrb[0].mxu0 %v247
      %v340 = vpop.f32.mrb[0].mxu0
      %v341 = vadd.f32 %v238, %v340
      %v342 = vpop.f32.mrb[0].mxu0
      %343 = vmatprep.mubr.f32.mxu0 0.0
      %344 = vmatmul.mubr.f32.gmra.mrb[0].mxu0 %v250
      %v345 = vpop.f32.mrb[0].mxu0
      %v346 = vadd.f32 %v238, %v345
      %v347 = vpop.f32.mrb[0].mxu0
      %348 = vmatprep.mubr.f32.mxu0 0.0
      %349 = vmatmul.mubr.f32.gmra.mrb[0].mxu0 %v253
      %v350 = vpop.f32.mrb[0].mxu0
      %v351 = vadd.f32 %v238, %v350
      %v352 = vpop.f32.mrb[0].mxu0
      %353 = vmatprep.mubr.f32.mxu0 0.0
      %354 = vmatmul.mubr.f32.gmra.mrb[0].mxu0 %v256
      %v355 = vpop.f32.mrb[0].mxu0
      %v356 = vadd.f32 %v238, %v355
      %v357 = vpop.f32.mrb[0].mxu0
      %358 = vmatprep.mubr.f32.mxu0 0.0
      %359 = vmatmul.mubr.f32.gmra.mrb[0].mxu0 %v259
      %v360 = vpop.f32.mrb[0].mxu0
      %v361 = vadd.f32 %v238, %v360
      %v362 = vpop.f32.mrb[0].mxu0
      %363 = vmatprep.mubr.f32.mxu0 0.0
      %364 = vmatmul.mubr.f32.gmra.mrb[0].mxu0 %v262
      %v365 = vpop.f32.mrb[0].mxu0
      %v366 = vadd.f32 %v238, %v365
      %v367 = vpop.f32.mrb[0].mxu0
      %368 = vdwg.mxu0
      %v369 = vmax.f32 %v331, 0.0
      %v370 = vmax.f32 %v336, 0.0
      %v371 = vmax.f32 %v341, 0.0
      %v372 = vmax.f32 %v346, 0.0
      %v373 = vmax.f32 %v351, 0.0
      %v374 = vmax.f32 %v356, 0.0
      %v375 = vmax.f32 %v361, 0.0
      %v376 = vmax.f32 %v366, 0.0
      %v377 = vld [vmem:[#allocation3] sm:$0xff]
      %v378 = vld [vmem:[#allocation3 + $0x8] sm:$0xff]
      %v379 = vld [vmem:[#allocation3 + $0x10] sm:$0xff]
      %v380 = vld [vmem:[#allocation3 + $0x18] sm:$0xff]
      %vm381 = vcmask 261120
      %v383 = vsel %vm381, %v369, 0
      %v386 = vsel %vm381, %v370, 0
      %v389 = vsel %vm381, %v371, 0
      %v392 = vsel %vm381, %v372, 0
      %v395 = vsel %vm381, %v373, 0
      %v398 = vsel %vm381, %v374, 0
      %v401 = vsel %vm381, %v375, 0
      %v404 = vsel %vm381, %v376, 0
      %406 = vmatprep.subr.mxu0 0.0
      %407 = vmatpush1.msra.mxu0 %v377
      %408 = vmatprep.subr.mxu0 0.0
      %409 = vmatpush1.msra.mxu0 %v378
      %410 = vmatprep.subr.mxu0 0.0
      %411 = vmatpush1.msra.mxu0 %v379
      %412 = vmatprep.subr.mxu0 0.0
      %413 = vmatpush1.msra.mxu0 %v380
      %414 = vmatprep.subr.mxu0 0.0
      %415 = vmatpush1.msra.mxu0 0.0
      %416 = vmatprep.subr.mxu0 0.0
      %417 = vmatpush1.msra.mxu0 0.0
      %418 = vmatprep.subr.mxu0 0.0
      %419 = vmatpush1.msra.mxu0 0.0
      %420 = vmatprep.subr.mxu0 0.0
      %421 = vmatpush1.msra.mxu0 0.0
      %422 = vmatprep.subr.mxu0 0.0
      %423 = vmatpush1.msra.mxu0 0.0
      %424 = vmatprep.subr.mxu0 0.0
      %425 = vmatpush1.msra.mxu0 0.0
      %426 = vmatprep.subr.mxu0 0.0
      %427 = vmatpush1.msra.mxu0 0.0
      %428 = vmatprep.subr.mxu0 0.0
      %429 = vmatpush1.msra.mxu0 0.0
      %430 = vmatprep.subr.mxu0 0.0
      %431 = vmatpush1.msra.mxu0 0.0
      %432 = vmatprep.subr.mxu0 0.0
      %433 = vmatpush1.msra.mxu0 0.0
      %434 = vmatprep.subr.mxu0 0.0
      %435 = vmatpush1.msra.mxu0 0.0
      %436 = vmatprep.subr.mxu0 0.0
      %437 = vmatpush1.msra.mxu0 0.0
      %438 = vmatprep.subr.mxu0 0.0
      %439 = vmatpush1.msra.mxu0 0.0
      %440 = vmatprep.subr.mxu0 0.0
      %441 = vmatpush1.msra.mxu0 0.0
      %442 = vmatprep.subr.mxu0 0.0
      %443 = vmatpush1.msra.mxu0 0.0
      %444 = vmatprep.subr.mxu0 0.0
      %445 = vmatpush1.msra.mxu0 0.0
      %446 = vmatprep.subr.mxu0 0.0
      %447 = vmatpush1.msra.mxu0 0.0
      %448 = vmatprep.subr.mxu0 0.0
      %449 = vmatpush1.msra.mxu0 0.0
      %450 = vmatprep.subr.mxu0 0.0
      %451 = vmatpush1.msra.mxu0 0.0
      %452 = vmatprep.subr.mxu0 0.0
      %453 = vmatpush1.msra.mxu0 0.0
      %454 = vmatprep.subr.mxu0 0.0
      %455 = vmatpush1.msra.mxu0 0.0
      %456 = vmatprep.subr.mxu0 0.0
      %457 = vmatpush1.msra.mxu0 0.0
      %458 = vmatprep.subr.mxu0 0.0
      %459 = vmatpush1.msra.mxu0 0.0
      %460 = vmatprep.subr.mxu0 0.0
      %461 = vmatpush1.msra.mxu0 0.0
      %462 = vmatprep.subr.mxu0 0.0
      %463 = vmatpush1.msra.mxu0 0.0
      %464 = vmatprep.subr.mxu0 0.0
      %465 = vmatpush1.msra.mxu0 0.0
      %466 = vmatprep.subr.mxu0 0.0
      %467 = vmatpush1.msra.mxu0 0.0
      %468 = vmatprep.subr.mxu0 0.0
      %469 = vmatpush1.msra.mxu0 0.0
      %470 = vmatprep.mubr.f32.mxu0 0.0
      %471 = vmatmul.mubr.f32.gmra.mrb[0].mxu0 %v383
      %v472 = vpop.f32.mrb[0].mxu0
      %v473 = vadd.f32 0.0, %v472
      %v474 = vpop.f32.mrb[0].mxu0
      %475 = vmatprep.mubr.f32.mxu0 0.0
      %476 = vmatmul.mubr.f32.gmra.mrb[0].mxu0 %v386
      %v477 = vpop.f32.mrb[0].mxu0
      %v478 = vadd.f32 0.0, %v477
      %v479 = vpop.f32.mrb[0].mxu0
      %480 = vmatprep.mubr.f32.mxu0 0.0
      %481 = vmatmul.mubr.f32.gmra.mrb[0].mxu0 %v389
      %v482 = vpop.f32.mrb[0].mxu0
      %v483 = vadd.f32 0.0, %v482
      %v484 = vpop.f32.mrb[0].mxu0
      %485 = vmatprep.mubr.f32.mxu0 0.0
      %486 = vmatmul.mubr.f32.gmra.mrb[0].mxu0 %v392
      %v487 = vpop.f32.mrb[0].mxu0
      %v488 = vadd.f32 0.0, %v487
      %v489 = vpop.f32.mrb[0].mxu0
      %490 = vmatprep.mubr.f32.mxu0 0.0
      %491 = vmatmul.mubr.f32.gmra.mrb[0].mxu0 %v395
      %v492 = vpop.f32.mrb[0].mxu0
      %v493 = vadd.f32 0.0, %v492
      %v494 = vpop.f32.mrb[0].mxu0
      %495 = vmatprep.mubr.f32.mxu0 0.0
      %496 = vmatmul.mubr.f32.gmra.mrb[0].mxu0 %v398
      %v497 = vpop.f32.mrb[0].mxu0
      %v498 = vadd.f32 0.0, %v497
      %v499 = vpop.f32.mrb[0].mxu0
      %500 = vmatprep.mubr.f32.mxu0 0.0
      %501 = vmatmul.mubr.f32.gmra.mrb[0].mxu0 %v401
      %v502 = vpop.f32.mrb[0].mxu0
      %v503 = vadd.f32 0.0, %v502
      %v504 = vpop.f32.mrb[0].mxu0
      %505 = vmatprep.mubr.f32.mxu0 0.0
      %506 = vmatmul.mubr.f32.gmra.mrb[0].mxu0 %v404
      %v507 = vpop.f32.mrb[0].mxu0
      %v508 = vadd.f32 0.0, %v507
      %v509 = vpop.f32.mrb[0].mxu0
      %510 = vdwg.mxu0
      %511 = vst.msk [vmem:[%s5] sm:$0xff] %vm381, %v473
      %512 = vst.msk [vmem:[%s5 + $0x8] sm:$0xff] %vm381, %v478
      %513 = vst.msk [vmem:[%s5 + $0x10] sm:$0xff] %vm381, %v483
      %514 = vst.msk [vmem:[%s5 + $0x18] sm:$0xff] %vm381, %v488
      %515 = vst.msk [vmem:[%s5 + $0x20] sm:$0xff] %vm381, %v493
      %516 = vst.msk [vmem:[%s5 + $0x28] sm:$0xff] %vm381, %v498
      %517 = vst.msk [vmem:[%s5 + $0x30] sm:$0xff] %vm381, %v503
      %518 = vst.msk [vmem:[%s5 + $0x38] sm:$0xff] %vm381, %v508
    $region33: #{tpu_custom_call.1} parent=1 // pred_fallthru
      _
    // Predicated region
    $region34: #{tpu_custom_call.1} parent=1 // pred_check
      _
    $region35: #{tpu_custom_call.1} parent=1 // pred_check_branch
      %520 = sbr.rel (0) target = $region37
    $region36: #{tpu_custom_call.1} parent=1 // pred_region
      _
    $region37: #{tpu_custom_call.1} parent=1 // pred_fallthru
      _
    // Predicated region
    $region38: #{tpu_custom_call.1} parent=1 // pred_check
      _
    $region39: #{tpu_custom_call.1} parent=1 // pred_check_branch
      %522 = sbr.rel (0) target = $region41
    $region40: #{tpu_custom_call.1} parent=1 // pred_region
      _
    $region41: #{tpu_custom_call.1} parent=1 // pred_fallthru
      _
    %523 = vsyncpa [#allocation4], 1

</llo_original>
